<compile_context>
chip_gen: v7x
topology: tpu7x:2x2x1
jax: 0.10.0
libtpu: 0.0.40
codegen_flags: <defaults>
</compile_context>

<pallas_src>
import functools

import jax
import jax.numpy as jnp
from jax.experimental import pallas as pl
from jax.experimental.pallas import tpu as pltpu


# --------------------------------------------------------------------------- #
# Pass 1: depthwise conv (k=3, s=2, pad=1) + per-block BN partial statistics. #
# --------------------------------------------------------------------------- #
def conv_stats_kernel(x_ref, w_ref, conv_ref, stats_ref, plane_ref, *, ksize):
    """Per grid step = one sample, one channel block (CB lanes).

      x_ref     : (1, H, W, CB)        input tile (input dtype)
      w_ref     : (k*k, CB)            depthwise filter taps
      conv_ref  : (1, OH, OW, CB)      f32 conv output (HBM intermediate)
      stats_ref : (1, 2, CB)           row 0 = sum, row 1 = sum((x-mean_blk)^2)
      plane_ref : (1, OH+1, OW+1, CB)  single reused parity-plane scratch
    """
    _, oh, ow, cb = conv_ref.shape
    f32 = jnp.float32
    w = w_ref[...].astype(f32)                       # (k*k, CB), hoisted once

    zrow = jnp.zeros((1, 1, ow + 1, cb), plane_ref.dtype)
    zcol = jnp.zeros((1, oh + 1, 1, cb), plane_ref.dtype)

    acc = None
    # Process one (hp, wp) parity of the stride-2 output at a time with a
    # single reused plane: plane[0, a, b, :] == x_zero_padded[2a+hp, 2b+wp, :].
    for hp in (0, 1):
        for wp in (0, 1):
            # Halo-only zeroing: only the plane row/col that taps read but the
            # interior fill does not write (hp==0 -> row 0, wp==0 -> col 0).
            if hp == 0:
                plane_ref[:, 0:1, :, :] = zrow
            if wp == 0:
                plane_ref[:, :, 0:1, :] = zcol
            # Stride-2 de-interleave of this parity (contiguous plane write,
            # strided x read).  NOTE: the stride-2 W slice sits on the sublane
            # axis; verified to lower on TPU (same pattern as the previous,
            # clean-running version of this kernel).
            r0, c0 = 1 - hp, 1 - wp
            plane_ref[:, r0:r0 + oh, c0:c0 + ow, :] = \
                x_ref[:, pl.ds(r0, oh, 2), pl.ds(c0, ow, 2), :]
            # All taps of this parity are contiguous offset slices of the plane.
            contrib = None
            for kh in range(hp, ksize, 2):
                for kw in range(wp, ksize, 2):
                    tap = plane_ref[:, kh // 2:kh // 2 + oh,
                                    kw // 2:kw // 2 + ow, :].astype(f32)
                    t = tap * w[kh * ksize + kw].reshape(1, 1, 1, cb)
                    contrib = t if contrib is None else contrib + t
            acc = contrib if acc is None else acc + contrib

    conv_ref[...] = acc

    # Per-block BN partials: sum + sum of squared deviations about the *block*
    # mean.  Blocks are combined with Chan's formula in the wrapper, which
    # avoids the catastrophic cancellation of a raw E[x^2]-E[x]^2 single pass.
    cnt = float(oh * ow)
    s1 = jnp.sum(acc, axis=(0, 1, 2), keepdims=True)            # (1,1,1,CB)
    d = acc - s1 / cnt
    m2 = jnp.sum(d * d, axis=(0, 1, 2), keepdims=True)          # (1,1,1,CB)
    stats_ref[:, 0:1, :] = s1.reshape(1, 1, cb)
    stats_ref[:, 1:2, :] = m2.reshape(1, 1, cb)


# --------------------------------------------------------------------------- #
# Pass 2: folded BN affine + ReLU on a lane-packed (OW*C) layout.             #
# --------------------------------------------------------------------------- #
def bn_relu_kernel(conv_ref, scale_ref, shift_ref, o_ref, *, relu):
    """conv_ref: (1, OH, OW*C) f32; scale/shift: (1, OW*C); o_ref: (1, OH, OW*C)."""
    s = scale_ref[...][:, None, :]
    t = shift_ref[...][:, None, :]
    y = conv_ref[...] * s + t
    if relu:
        y = jnp.maximum(y, 0.0)
    o_ref[...] = y.astype(o_ref.dtype)


def _vmem_limit_bytes():
    """Generation-aware scoped-VMEM limit: ~7/8 of physical, capped/floored."""
    mib = 1024 * 1024
    try:
        cap = int(pltpu.get_tpu_info().vmem_capacity_bytes)
    except Exception:
        cap = 64 * mib                      # conservative fallback (safe on v7x)
    return int(max(32 * mib, min(112 * mib, cap * 7 // 8)))


def downblock_pallas(x_nchw, conv_w, gamma, beta, *,
                     kernel_size=3, stride=2, padding=1, eps=1e-5, relu=True):
    """x_nchw: (N, C, H, W); conv_w: (C, 1, k, k) depthwise weight (no bias)."""
    N, C, H, W = x_nchw.shape
    # Fast path is specialized to the Downblock defaults (k=3, s=2, pad=1).
    # TODO(synk): generic kernel_size/stride/padding and odd H/W need a
    # separate path; the module defaults (3/2/1, even spatial) are covered.
    assert kernel_size == 3 and stride == 2 and padding == 1
    assert H % 2 == 0 and W % 2 == 0
    OH, OW = H // 2, W // 2
    k2 = kernel_size * kernel_size

    # Channel blocking.  Avoid HBM channel padding (this op is bandwidth-bound):
    # for C < 128 use the full channel extent as the lane block (legal: block
    # last dim == full array dim); only pad for large, non-128-multiple C.
    if C % 128 == 0:
        CB, Cp = 128, C
    elif C < 128:
        CB, Cp = C, C
    else:
        Cp = ((C + 127) // 128) * 128
        CB = 128

    # Layout plumbing only: NCHW -> NHWC (channels on lanes).
    x_nhwc = jnp.transpose(x_nchw, (0, 2, 3, 1))
    w_taps = conv_w[:, 0].reshape(C, k2).T                 # (k*k, C), row = kh*k+kw
    g = gamma.reshape(C).astype(jnp.float32)
    b = beta.reshape(C).astype(jnp.float32)
    if Cp != C:
        x_nhwc = jnp.pad(x_nhwc, ((0, 0), (0, 0), (0, 0), (0, Cp - C)))
        w_taps = jnp.pad(w_taps, ((0, 0), (0, Cp - C)))
        g = jnp.pad(g, (0, Cp - C), constant_values=1.0)
        b = jnp.pad(b, (0, Cp - C))

    vmem_limit = _vmem_limit_bytes()

    # ---- pass 1: conv + per-(n, channel-block) partial stats -----------------
    # TODO(synk): for very large per-sample H*W add an output-row grid axis
    # (halo rows via pl.Element or manual DMA); per-sample tiling is sufficient
    # for typical GE-Net shapes and keeps per-step VMEM ~H*W*CB*dtype.
    conv_f32, stats = pl.pallas_call(
        functools.partial(conv_stats_kernel, ksize=kernel_size),
        out_shape=(jax.ShapeDtypeStruct((N, OH, OW, Cp), jnp.float32),
                   jax.ShapeDtypeStruct((N, 2, Cp), jnp.float32)),
        grid_spec=pltpu.PrefetchScalarGridSpec(
            num_scalar_prefetch=0,
            grid=(N, Cp // CB),
            in_specs=[
                pl.BlockSpec((1, H, W, CB), lambda n, c: (n, 0, 0, c)),
                pl.BlockSpec((k2, CB), lambda n, c: (0, c)),
            ],
            out_specs=(
                pl.BlockSpec((1, OH, OW, CB), lambda n, c: (n, 0, 0, c)),
                pl.BlockSpec((1, 2, CB), lambda n, c: (n, 0, c)),
            ),
            scratch_shapes=[pltpu.VMEM((1, OH + 1, OW + 1, CB), x_nhwc.dtype)],
        ),
        compiler_params=pltpu.CompilerParams(
            dimension_semantics=("parallel", "parallel"),
            vmem_limit_bytes=vmem_limit,
        ),
    )(x_nhwc, w_taps)

    # ---- combine partial stats (tiny per-channel arrays, plain JAX) ----------
    cnt_b = float(OH * OW)                    # elements per (n, block) per channel
    total = float(N) * cnt_b
    s1 = stats[:, 0, :]                       # (N, Cp)
    m2 = stats[:, 1, :]                       # (N, Cp)
    mean_b = s1 / cnt_b
    mean = jnp.sum(s1, axis=0) / total        # (Cp,)
    m2_tot = jnp.sum(m2, axis=0) + cnt_b * jnp.sum((mean_b - mean[None, :]) ** 2, axis=0)
    var = m2_tot / total                      # biased variance (matches BN norm)
    inv = jax.lax.rsqrt(var + eps)
    scale_c = g * inv                         # folded BN affine
    shift_c = b - mean * scale_c
    # TODO(synk): nn.BatchNorm2d running_mean/running_var momentum updates are a
    # training-time module-state side effect with no impact on the returned
    # tensor; they are not modeled here.

    # ---- pass 2: lane-packed normalize + ReLU ---------------------------------
    OWC = OW * Cp
    conv_packed = conv_f32.reshape(N, OH, OWC)          # contiguous merge (free)
    scale = jnp.tile(scale_c, OW).reshape(1, OWC)       # packed index = w*Cp + c
    shift = jnp.tile(shift_c, OW).reshape(1, OWC)

    out_packed = pl.pallas_call(
        functools.partial(bn_relu_kernel, relu=relu),
        out_shape=jax.ShapeDtypeStruct((N, OH, OWC), x_nchw.dtype),
        grid_spec=pltpu.PrefetchScalarGridSpec(
            num_scalar_prefetch=0,
            grid=(N,),
            in_specs=[
                pl.BlockSpec((1, OH, OWC), lambda n: (n, 0, 0)),
                pl.BlockSpec((1, OWC), lambda n: (0, 0)),
                pl.BlockSpec((1, OWC), lambda n: (0, 0)),
            ],
            out_specs=pl.BlockSpec((1, OH, OWC), lambda n: (n, 0, 0)),
        ),
        compiler_params=pltpu.CompilerParams(
            dimension_semantics=("parallel",),
            vmem_limit_bytes=vmem_limit,
        ),
    )(conv_packed, scale, shift)

    out = out_packed.reshape(N, OH, OW, Cp)[..., :C]
    return jnp.transpose(out, (0, 3, 1, 2))              # back to NCHW


def downblock_reference(x_nchw, conv_w, gamma, beta, *,
                        kernel_size=3, stride=2, padding=1, eps=1e-5, relu=True):
    """Pure-JAX reference matching PyTorch Downblock.forward (training-mode BN)."""
    C = x_nchw.shape[1]
    conv = jax.lax.conv_general_dilated(
        x_nchw.astype(jnp.float32), conv_w.astype(jnp.float32),
        window_strides=(stride, stride),
        padding=((padding, padding), (padding, padding)),
        dimension_numbers=("NCHW", "OIHW", "NCHW"),
        feature_group_count=C)
    mean = conv.mean(axis=(0, 2, 3), keepdims=True)
    var = ((conv - mean) ** 2).mean(axis=(0, 2, 3), keepdims=True)
    y = (conv - mean) / jnp.sqrt(var + eps)
    y = y * gamma.reshape(1, C, 1, 1) + beta.reshape(1, C, 1, 1)
    return jnp.maximum(y, 0.0) if relu else y


if __name__ == "__main__":
    key = jax.random.PRNGKey(0)
    k_x, k_w, k_g, k_b = jax.random.split(key, 4)

    N, C, H, W = 2, 4, 16, 16
    # +3.0 mean offset stresses BN-variance numerics (per review): the per-block
    # M2 + Chan combination stays stable where E[x^2]-E[x]^2 would not.
    x = jax.random.normal(k_x, (N, C, H, W), dtype=jnp.float32) + 3.0

    # Depthwise conv weight (C,1,3,3), no bias; BN affine params.
    conv_w = 0.3 * jax.random.normal(k_w, (C, 1, 3, 3), dtype=jnp.float32)
    gamma = 1.0 + 0.1 * jax.random.normal(k_g, (C,), dtype=jnp.float32)
    beta = 0.1 * jax.random.normal(k_b, (C,), dtype=jnp.float32)

    out = downblock_pallas(x, conv_w, gamma, beta)
    out = jax.block_until_ready(out)

    ref = downblock_reference(x, conv_w, gamma, beta)
    assert out.shape == (N, C, H // 2, W // 2), out.shape
    err = float(jnp.max(jnp.abs(out - ref)))
    assert err < 2e-4, err
    print("KERNEL_OK")
</pallas_src>

<mosaic_0001>
module attributes {stable_mosaic.version = 11 : i64} {
  func.func @conv_stats_kernel(%arg0: i32, %arg1: i32, %arg2: memref<1x16x16x4xf32, #tpu.memory_space<vmem>>, %arg3: memref<9x4xf32, #tpu.memory_space<vmem>>, %arg4: memref<1x8x8x4xf32, #tpu.memory_space<vmem>>, %arg5: memref<1x2x4xf32, #tpu.memory_space<vmem>>, %arg6: memref<1x9x9x4xf32, #tpu.memory_space<vmem>>) attributes {dimension_semantics = [#tpu.dimension_semantics<parallel>, #tpu.dimension_semantics<parallel>], iteration_bounds = array<i64: 2, 1>, scalar_prefetch = 0 : i64, scratch_operands = 1 : i64, tpu.core_type = #tpu.core_type<tc>, window_params = [{transform_indices = @transform_0, window_bounds = array<i64: 1, 16, 16, 4>}, {transform_indices = @transform_1, window_bounds = array<i64: 9, 4>}, {transform_indices = @transform_2, window_bounds = array<i64: 1, 8, 8, 4>}, {transform_indices = @transform_3, window_bounds = array<i64: 1, 2, 4>}]} {
    %c0 = arith.constant 0 : index
    %c0_0 = arith.constant 0 : index
    %0 = vector.load %arg3[%c0, %c0_0] : memref<9x4xf32, #tpu.memory_space<vmem>>, vector<9x4xf32>
    %cst = arith.constant 0.000000e+00 : f32
    %1 = vector.broadcast %cst : f32 to vector<1x1x9x4xf32>
    %cst_1 = arith.constant 0.000000e+00 : f32
    %2 = vector.broadcast %cst_1 : f32 to vector<1x9x1x4xf32>
    %c0_2 = arith.constant 0 : index
    %c0_3 = arith.constant 0 : index
    %c0_4 = arith.constant 0 : index
    %c0_5 = arith.constant 0 : index
    %3 = vector.load %arg6[%c0_2, %c0_3, %c0_4, %c0_5] : memref<1x9x9x4xf32, #tpu.memory_space<vmem>>, vector<1x1x9x4xf32>
    tpu.vector_store %arg6[%c0_2, %c0_3, %c0_4, %c0_5], %1 {strides = array<i32>} : memref<1x9x9x4xf32, #tpu.memory_space<vmem>>, vector<1x1x9x4xf32>,
    %c0_6 = arith.constant 0 : index
    %c0_7 = arith.constant 0 : index
    %c0_8 = arith.constant 0 : index
    %c0_9 = arith.constant 0 : index
    %4 = vector.load %arg6[%c0_6, %c0_7, %c0_8, %c0_9] : memref<1x9x9x4xf32, #tpu.memory_space<vmem>>, vector<1x9x1x4xf32>
    tpu.vector_store %arg6[%c0_6, %c0_7, %c0_8, %c0_9], %2 {strides = array<i32>} : memref<1x9x9x4xf32, #tpu.memory_space<vmem>>, vector<1x9x1x4xf32>,
    %c0_10 = arith.constant 0 : index
    %c1 = arith.constant 1 : index
    %c1_11 = arith.constant 1 : index
    %c0_12 = arith.constant 0 : index
    %5 = tpu.strided_load %arg2[%c0_10, %c1, %c1_11, %c0_12] {strides = array<i32: 1, 2, 2, 1>} : memref<1x16x16x4xf32, #tpu.memory_space<vmem>>, vector<1x8x8x4xf32>
    %c0_13 = arith.constant 0 : index
    %c1_14 = arith.constant 1 : index
    %c1_15 = arith.constant 1 : index
    %c0_16 = arith.constant 0 : index
    %6 = vector.load %arg6[%c0_13, %c1_14, %c1_15, %c0_16] : memref<1x9x9x4xf32, #tpu.memory_space<vmem>>, vector<1x8x8x4xf32>
    tpu.vector_store %arg6[%c0_13, %c1_14, %c1_15, %c0_16], %5 {strides = array<i32>} : memref<1x9x9x4xf32, #tpu.memory_space<vmem>>, vector<1x8x8x4xf32>,
    %c0_17 = arith.constant 0 : index
    %c0_18 = arith.constant 0 : index
    %c0_19 = arith.constant 0 : index
    %c0_20 = arith.constant 0 : index
    %7 = vector.load %arg6[%c0_17, %c0_18, %c0_19, %c0_20] : memref<1x9x9x4xf32, #tpu.memory_space<vmem>>, vector<1x8x8x4xf32>
    %8 = vector.extract_strided_slice %0 {offsets = [0, 0], sizes = [1, 4], strides = [1, 1]} : vector<9x4xf32> to vector<1x4xf32>
    %9 = vector.shape_cast %8 : vector<1x4xf32> to vector<4xf32>
    %10 = vector.shape_cast %9 : vector<4xf32> to vector<1x1x1x4xf32>
    %11 = vector.broadcast %10 : vector<1x1x1x4xf32> to vector<1x8x8x4xf32>
    %12 = arith.mulf %7, %11 : vector<1x8x8x4xf32>
    %c0_21 = arith.constant 0 : index
    %c0_22 = arith.constant 0 : index
    %c1_23 = arith.constant 1 : index
    %c0_24 = arith.constant 0 : index
    %13 = vector.load %arg6[%c0_21, %c0_22, %c1_23, %c0_24] : memref<1x9x9x4xf32, #tpu.memory_space<vmem>>, vector<1x8x8x4xf32>
    %14 = vector.extract_strided_slice %0 {offsets = [2, 0], sizes = [1, 4], strides = [1, 1]} : vector<9x4xf32> to vector<1x4xf32>
    %15 = vector.shape_cast %14 : vector<1x4xf32> to vector<4xf32>
    %16 = vector.shape_cast %15 : vector<4xf32> to vector<1x1x1x4xf32>
    %17 = vector.broadcast %16 : vector<1x1x1x4xf32> to vector<1x8x8x4xf32>
    %18 = arith.mulf %13, %17 : vector<1x8x8x4xf32>
    %19 = arith.addf %12, %18 : vector<1x8x8x4xf32>
    %c0_25 = arith.constant 0 : index
    %c1_26 = arith.constant 1 : index
    %c0_27 = arith.constant 0 : index
    %c0_28 = arith.constant 0 : index
    %20 = vector.load %arg6[%c0_25, %c1_26, %c0_27, %c0_28] : memref<1x9x9x4xf32, #tpu.memory_space<vmem>>, vector<1x8x8x4xf32>
    %21 = vector.extract_strided_slice %0 {offsets = [6, 0], sizes = [1, 4], strides = [1, 1]} : vector<9x4xf32> to vector<1x4xf32>
    %22 = vector.shape_cast %21 : vector<1x4xf32> to vector<4xf32>
    %23 = vector.shape_cast %22 : vector<4xf32> to vector<1x1x1x4xf32>
    %24 = vector.broadcast %23 : vector<1x1x1x4xf32> to vector<1x8x8x4xf32>
    %25 = arith.mulf %20, %24 : vector<1x8x8x4xf32>
    %26 = arith.addf %19, %25 : vector<1x8x8x4xf32>
    %c0_29 = arith.constant 0 : index
    %c1_30 = arith.constant 1 : index
    %c1_31 = arith.constant 1 : index
    %c0_32 = arith.constant 0 : index
    %27 = vector.load %arg6[%c0_29, %c1_30, %c1_31, %c0_32] : memref<1x9x9x4xf32, #tpu.memory_space<vmem>>, vector<1x8x8x4xf32>
    %28 = vector.extract_strided_slice %0 {offsets = [8, 0], sizes = [1, 4], strides = [1, 1]} : vector<9x4xf32> to vector<1x4xf32>
    %29 = vector.shape_cast %28 : vector<1x4xf32> to vector<4xf32>
    %30 = vector.shape_cast %29 : vector<4xf32> to vector<1x1x1x4xf32>
    %31 = vector.broadcast %30 : vector<1x1x1x4xf32> to vector<1x8x8x4xf32>
    %32 = arith.mulf %27, %31 : vector<1x8x8x4xf32>
    %33 = arith.addf %26, %32 : vector<1x8x8x4xf32>
    %c0_33 = arith.constant 0 : index
    %c0_34 = arith.constant 0 : index
    %c0_35 = arith.constant 0 : index
    %c0_36 = arith.constant 0 : index
    %34 = vector.load %arg6[%c0_33, %c0_34, %c0_35, %c0_36] : memref<1x9x9x4xf32, #tpu.memory_space<vmem>>, vector<1x1x9x4xf32>
    tpu.vector_store %arg6[%c0_33, %c0_34, %c0_35, %c0_36], %1 {strides = array<i32>} : memref<1x9x9x4xf32, #tpu.memory_space<vmem>>, vector<1x1x9x4xf32>,
    %c0_37 = arith.constant 0 : index
    %c1_38 = arith.constant 1 : index
    %c0_39 = arith.constant 0 : index
    %c0_40 = arith.constant 0 : index
    %35 = tpu.strided_load %arg2[%c0_37, %c1_38, %c0_39, %c0_40] {strides = array<i32: 1, 2, 2, 1>} : memref<1x16x16x4xf32, #tpu.memory_space<vmem>>, vector<1x8x8x4xf32>
    %c0_41 = arith.constant 0 : index
    %c1_42 = arith.constant 1 : index
    %c0_43 = arith.constant 0 : index
    %c0_44 = arith.constant 0 : index
    %36 = vector.load %arg6[%c0_41, %c1_42, %c0_43, %c0_44] : memref<1x9x9x4xf32, #tpu.memory_space<vmem>>, vector<1x8x8x4xf32>
    tpu.vector_store %arg6[%c0_41, %c1_42, %c0_43, %c0_44], %35 {strides = array<i32>} : memref<1x9x9x4xf32, #tpu.memory_space<vmem>>, vector<1x8x8x4xf32>,
    %c0_45 = arith.constant 0 : index
    %c0_46 = arith.constant 0 : index
    %c0_47 = arith.constant 0 : index
    %c0_48 = arith.constant 0 : index
    %37 = vector.load %arg6[%c0_45, %c0_46, %c0_47, %c0_48] : memref<1x9x9x4xf32, #tpu.memory_space<vmem>>, vector<1x8x8x4xf32>
    %38 = vector.extract_strided_slice %0 {offsets = [1, 0], sizes = [1, 4], strides = [1, 1]} : vector<9x4xf32> to vector<1x4xf32>
    %39 = vector.shape_cast %38 : vector<1x4xf32> to vector<4xf32>
    %40 = vector.shape_cast %39 : vector<4xf32> to vector<1x1x1x4xf32>
    %41 = vector.broadcast %40 : vector<1x1x1x4xf32> to vector<1x8x8x4xf32>
    %42 = arith.mulf %37, %41 : vector<1x8x8x4xf32>
    %c0_49 = arith.constant 0 : index
    %c1_50 = arith.constant 1 : index
    %c0_51 = arith.constant 0 : index
    %c0_52 = arith.constant 0 : index
    %43 = vector.load %arg6[%c0_49, %c1_50, %c0_51, %c0_52] : memref<1x9x9x4xf32, #tpu.memory_space<vmem>>, vector<1x8x8x4xf32>
    %44 = vector.extract_strided_slice %0 {offsets = [7, 0], sizes = [1, 4], strides = [1, 1]} : vector<9x4xf32> to vector<1x4xf32>
    %45 = vector.shape_cast %44 : vector<1x4xf32> to vector<4xf32>
    %46 = vector.shape_cast %45 : vector<4xf32> to vector<1x1x1x4xf32>
    %47 = vector.broadcast %46 : vector<1x1x1x4xf32> to vector<1x8x8x4xf32>
    %48 = arith.mulf %43, %47 : vector<1x8x8x4xf32>
    %49 = arith.addf %42, %48 : vector<1x8x8x4xf32>
    %50 = arith.addf %33, %49 : vector<1x8x8x4xf32>
    %c0_53 = arith.constant 0 : index
    %c0_54 = arith.constant 0 : index
    %c0_55 = arith.constant 0 : index
    %c0_56 = arith.constant 0 : index
    %51 = vector.load %arg6[%c0_53, %c0_54, %c0_55, %c0_56] : memref<1x9x9x4xf32, #tpu.memory_space<vmem>>, vector<1x9x1x4xf32>
    tpu.vector_store %arg6[%c0_53, %c0_54, %c0_55, %c0_56], %2 {strides = array<i32>} : memref<1x9x9x4xf32, #tpu.memory_space<vmem>>, vector<1x9x1x4xf32>,
    %c0_57 = arith.constant 0 : index
    %c0_58 = arith.constant 0 : index
    %c1_59 = arith.constant 1 : index
    %c0_60 = arith.constant 0 : index
    %52 = tpu.strided_load %arg2[%c0_57, %c0_58, %c1_59, %c0_60] {strides = array<i32: 1, 2, 2, 1>} : memref<1x16x16x4xf32, #tpu.memory_space<vmem>>, vector<1x8x8x4xf32>
    %c0_61 = arith.constant 0 : index
    %c0_62 = arith.constant 0 : index
    %c1_63 = arith.constant 1 : index
    %c0_64 = arith.constant 0 : index
    %53 = vector.load %arg6[%c0_61, %c0_62, %c1_63, %c0_64] : memref<1x9x9x4xf32, #tpu.memory_space<vmem>>, vector<1x8x8x4xf32>
    tpu.vector_store %arg6[%c0_61, %c0_62, %c1_63, %c0_64], %52 {strides = array<i32>} : memref<1x9x9x4xf32, #tpu.memory_space<vmem>>, vector<1x8x8x4xf32>,
    %c0_65 = arith.constant 0 : index
    %c0_66 = arith.constant 0 : index
    %c0_67 = arith.constant 0 : index
    %c0_68 = arith.constant 0 : index
    %54 = vector.load %arg6[%c0_65, %c0_66, %c0_67, %c0_68] : memref<1x9x9x4xf32, #tpu.memory_space<vmem>>, vector<1x8x8x4xf32>
    %55 = vector.extract_strided_slice %0 {offsets = [3, 0], sizes = [1, 4], strides = [1, 1]} : vector<9x4xf32> to vector<1x4xf32>
    %56 = vector.shape_cast %55 : vector<1x4xf32> to vector<4xf32>
    %57 = vector.shape_cast %56 : vector<4xf32> to vector<1x1x1x4xf32>
    %58 = vector.broadcast %57 : vector<1x1x1x4xf32> to vector<1x8x8x4xf32>
    %59 = arith.mulf %54, %58 : vector<1x8x8x4xf32>
    %c0_69 = arith.constant 0 : index
    %c0_70 = arith.constant 0 : index
    %c1_71 = arith.constant 1 : index
    %c0_72 = arith.constant 0 : index
    %60 = vector.load %arg6[%c0_69, %c0_70, %c1_71, %c0_72] : memref<1x9x9x4xf32, #tpu.memory_space<vmem>>, vector<1x8x8x4xf32>
    %61 = vector.extract_strided_slice %0 {offsets = [5, 0], sizes = [1, 4], strides = [1, 1]} : vector<9x4xf32> to vector<1x4xf32>
    %62 = vector.shape_cast %61 : vector<1x4xf32> to vector<4xf32>
    %63 = vector.shape_cast %62 : vector<4xf32> to vector<1x1x1x4xf32>
    %64 = vector.broadcast %63 : vector<1x1x1x4xf32> to vector<1x8x8x4xf32>
    %65 = arith.mulf %60, %64 : vector<1x8x8x4xf32>
    %66 = arith.addf %59, %65 : vector<1x8x8x4xf32>
    %67 = arith.addf %50, %66 : vector<1x8x8x4xf32>
    %c0_73 = arith.constant 0 : index
    %c0_74 = arith.constant 0 : index
    %c0_75 = arith.constant 0 : index
    %c0_76 = arith.constant 0 : index
    %68 = tpu.strided_load %arg2[%c0_73, %c0_74, %c0_75, %c0_76] {strides = array<i32: 1, 2, 2, 1>} : memref<1x16x16x4xf32, #tpu.memory_space<vmem>>, vector<1x8x8x4xf32>
    %c0_77 = arith.constant 0 : index
    %c0_78 = arith.constant 0 : index
    %c0_79 = arith.constant 0 : index
    %c0_80 = arith.constant 0 : index
    %69 = vector.load %arg6[%c0_77, %c0_78, %c0_79, %c0_80] : memref<1x9x9x4xf32, #tpu.memory_space<vmem>>, vector<1x8x8x4xf32>
    tpu.vector_store %arg6[%c0_77, %c0_78, %c0_79, %c0_80], %68 {strides = array<i32>} : memref<1x9x9x4xf32, #tpu.memory_space<vmem>>, vector<1x8x8x4xf32>,
    %c0_81 = arith.constant 0 : index
    %c0_82 = arith.constant 0 : index
    %c0_83 = arith.constant 0 : index
    %c0_84 = arith.constant 0 : index
    %70 = vector.load %arg6[%c0_81, %c0_82, %c0_83, %c0_84] : memref<1x9x9x4xf32, #tpu.memory_space<vmem>>, vector<1x8x8x4xf32>
    %71 = vector.extract_strided_slice %0 {offsets = [4, 0], sizes = [1, 4], strides = [1, 1]} : vector<9x4xf32> to vector<1x4xf32>
    %72 = vector.shape_cast %71 : vector<1x4xf32> to vector<4xf32>
    %73 = vector.shape_cast %72 : vector<4xf32> to vector<1x1x1x4xf32>
    %74 = vector.broadcast %73 : vector<1x1x1x4xf32> to vector<1x8x8x4xf32>
    %75 = arith.mulf %70, %74 : vector<1x8x8x4xf32>
    %76 = arith.addf %67, %75 : vector<1x8x8x4xf32>
    %c0_85 = arith.constant 0 : index
    %c0_86 = arith.constant 0 : index
    %c0_87 = arith.constant 0 : index
    %c0_88 = arith.constant 0 : index
    %77 = vector.load %arg4[%c0_85, %c0_86, %c0_87, %c0_88] : memref<1x8x8x4xf32, #tpu.memory_space<vmem>>, vector<1x8x8x4xf32>
    tpu.vector_store %arg4[%c0_85, %c0_86, %c0_87, %c0_88], %76 {strides = array<i32>} : memref<1x8x8x4xf32, #tpu.memory_space<vmem>>, vector<1x8x8x4xf32>,
    %cst_89 = arith.constant dense<0.000000e+00> : vector<4xf32>
    %78 = vector.multi_reduction <add>, %76, %cst_89 [0, 1, 2] : vector<1x8x8x4xf32> to vector<4xf32>
    %79 = vector.shape_cast %78 : vector<4xf32> to vector<1x1x1x4xf32>
    %cst_90 = arith.constant 6.400000e+01 : f32
    %80 = vector.broadcast %cst_90 : f32 to vector<1x1x1x4xf32>
    %81 = arith.divf %79, %80 : vector<1x1x1x4xf32>
    %82 = vector.broadcast %81 : vector<1x1x1x4xf32> to vector<1x8x8x4xf32>
    %83 = arith.subf %76, %82 : vector<1x8x8x4xf32>
    %84 = arith.mulf %83, %83 : vector<1x8x8x4xf32>
    %cst_91 = arith.constant dense<0.000000e+00> : vector<4xf32>
    %85 = vector.multi_reduction <add>, %84, %cst_91 [0, 1, 2] : vector<1x8x8x4xf32> to vector<4xf32>
    %86 = vector.shape_cast %85 : vector<4xf32> to vector<1x1x1x4xf32>
    %87 = vector.shape_cast %79 : vector<1x1x1x4xf32> to vector<1x1x4xf32>
    %c0_92 = arith.constant 0 : index
    %c0_93 = arith.constant 0 : index
    %c0_94 = arith.constant 0 : index
    %88 = vector.load %arg5[%c0_92, %c0_93, %c0_94] : memref<1x2x4xf32, #tpu.memory_space<vmem>>, vector<1x1x4xf32>
    tpu.vector_store %arg5[%c0_92, %c0_93, %c0_94], %87 {strides = array<i32>} : memref<1x2x4xf32, #tpu.memory_space<vmem>>, vector<1x1x4xf32>,
    %89 = vector.shape_cast %86 : vector<1x1x1x4xf32> to vector<1x1x4xf32>
    %c0_95 = arith.constant 0 : index
    %c1_96 = arith.constant 1 : index
    %c0_97 = arith.constant 0 : index
    %90 = vector.load %arg5[%c0_95, %c1_96, %c0_97] : memref<1x2x4xf32, #tpu.memory_space<vmem>>, vector<1x1x4xf32>
    tpu.vector_store %arg5[%c0_95, %c1_96, %c0_97], %89 {strides = array<i32>} : memref<1x2x4xf32, #tpu.memory_space<vmem>>, vector<1x1x4xf32>,
    return
  }
  func.func @transform_0(%arg0: i32, %arg1: i32) -> (i32, i32, i32, i32) {
    %c0_i32 = arith.constant 0 : i32
    %c0_i32_0 = arith.constant 0 : i32
    %c0_i32_1 = arith.constant 0 : i32
    return %arg0, %c0_i32, %c0_i32_0, %arg1 : i32, i32, i32, i32
  }
  func.func @transform_1(%arg0: i32, %arg1: i32) -> (i32, i32) {
    %c0_i32 = arith.constant 0 : i32
    %c0_i32_0 = arith.constant 0 : i32
    return %c0_i32, %arg1 : i32, i32
  }
  func.func @transform_2(%arg0: i32, %arg1: i32) -> (i32, i32, i32, i32) {
    %c0_i32 = arith.constant 0 : i32
    %c0_i32_0 = arith.constant 0 : i32
    %c0_i32_1 = arith.constant 0 : i32
    return %arg0, %c0_i32, %c0_i32_0, %arg1 : i32, i32, i32, i32
  }
  func.func @transform_3(%arg0: i32, %arg1: i32) -> (i32, i32, i32) {
    %c0_i32 = arith.constant 0 : i32
    %c0_i32_0 = arith.constant 0 : i32
    return %arg0, %c0_i32, %arg1 : i32, i32, i32
  }
}

</mosaic_0001>

<llo_original>
// kernel: tpu_custom_call.1
$region0: #{tpu_custom_call.1}
  #allocation0 [shape = 'u32[]', space=smem, size = 0x4, offset = 0x4, fixed_abs, tag = 'smem constant byte address 0x4 - core index']
  #allocation1 [shape = 'u32[144,128]{1,0:T(1,128)}', space=vmem, size = 0x12000, scoped, tag = 'internal scratch']
  #allocation2 [shape = 'f32[1,9,9,4]{3,2,1,0:T(8,128)}', space=vmem, size = 0x12000, scoped, tag = 'scratch operand']
  %s0 = inlined_call_operand.vmem [shape: f32[2,16,16,4], index: 0, kind: input, shape index: {}]
  %s1 = inlined_call_operand.vmem [shape: f32[9,4], index: 1, kind: input, shape index: {}]
  %s2 = inlined_call_operand.vmem [shape: f32[2,8,8,4], index: 2, kind: output, shape index: {0}]
  %s3 = inlined_call_operand.hbm [shape: f32[2,2,4], index: 3, kind: output, shape index: {1}]
  %4 = xla_tuple %s2, %s3
  %s5 = sld [smem:[#allocation0]]
  $region49: #{tpu_custom_call.1} parent=0
    _
  %s7 = ssub.s32 1, %s5
  %s8 = scalar_select 0, %s7, %s5
  $region1: #{tpu_custom_call.1} parent=0
    #allocation3 [shape = 'u8[2048]{0}', space=vmem, size = 0x800, scoped, tag = 'output window, operand 1']
    #allocation4 [shape = 's32[2]{0}', space=sflag, size = 0x8, scoped, tag = 'scoped memory for tpu_custom_call.1']
    %9 = vsyncpa [#allocation4], 0
    %s10 = scalar_lea.sflag [#allocation4], 1
    %11 = vsyncpa %s10, 0
    loop: start=0, step=1, limit=4
    $region2: #{tpu_custom_call.1} parent=1 // loop_pre_header
      _
    $region3: #{tpu_custom_call.1} parent=1 // loop_header
      %s13 = sphi 0, %s17
      %p14 = scmp.ge.s32.totalorder %s13, 4
      %s20 = sphi 0, %s32
      %s21 = sphi 0, %s28
      %s22 = sphi 0, %s20
      %s23 = sphi 0, %s21
      %s24 = sphi 0, %s22
      %s25 = sphi 0, %s23
      %s37 = sphi 0, %s39
      %s40 = sphi 0, %s37
      %s41 = sphi 0, %s40
      %s57 = sphi 0, %s41
      %s63 = sphi 0, %s65
      %s66 = sphi 0, %s63
      %s67 = sphi 0, %s66
      %s83 = sphi 0, %s67
      %s91 = sphi 0, %s93
      %s94 = sphi 0, %s91
      %s95 = sphi 0, %s94
      %s111 = sphi 0, %s95
      %s119 = sphi 0, %s121
      %s122 = sphi 0, %s119
      %s123 = sphi 0, %s122
      %s139 = sphi 0, %s123
    $region4: #{tpu_custom_call.1} parent=1 // loop_header_branch
      %16 = sbr.rel (%p14) target = $region8
    $region5: #{tpu_custom_call.1} parent=1 // loop_body
      %s18 = ssub.s32 %s13, 1
      %s19 = ssub.s32 %s13, 2
      %s26 = sadd.s32 1, %s21
      %p27 = scmp.ge.s32.totalorder %s26, 1
      %s28 = scalar_select %p27, 0, %s26
      %s29 = sadd.s32 1, %s20
      %s30 = scalar_select %p27, %s29, %s20
      %p31 = scmp.ge.s32.totalorder %s30, 2
      %s32 = scalar_select %p31, 0, %s30
      %s33 = ssub.s32 %s20, %s32
      %s34 = ssub.s32 %s21, %s28
      %s35 = sor.u32 %s33, %s34
      %p36 = scmp.eq.s32.totalorder %s35, 0
      %s38 = sadd.s32 %s37, 1
      %s39 = scalar_select %p36, %s37, %s38
      %p42 = pneg %p36
      %p43 = scmp.eq.s32.totalorder %s13, 1
      %p44 = por %p42, %p43
      %p45 = scmp.ne.s32.totalorder %s37, %s40
      %p46 = scmp.eq.s32.totalorder %s13, 0
      %p47 = por %p45, %p46
      %p48 = scmp.ne.s32.totalorder %s37, %s40
      %p49 = scmp.eq.s32.totalorder %s18, 1
      %p50 = por %p48, %p49
      %p51 = scmp.ne.s32.totalorder %s40, %s41
      %p52 = scmp.eq.s32.totalorder %s18, 0
      %p53 = por %p51, %p52
      %p54 = scmp.ne.s32.totalorder %s40, %s41
      %p55 = scmp.eq.s32.totalorder %s19, 1
      %p56 = por %p54, %p55
      %p58 = scmp.ne.s32.totalorder %s41, %s57
      %p59 = scmp.eq.s32.totalorder %s19, 0
      %p60 = por %p58, %p59
      %s61 = ssub.s32 %s21, %s28
      %p62 = scmp.eq.s32.totalorder %s61, 0
      %s64 = sadd.s32 %s63, 1
      %s65 = scalar_select %p62, %s63, %s64
      %p68 = pneg %p62
      %p69 = scmp.eq.s32.totalorder %s13, 1
      %p70 = por %p68, %p69
      %p71 = scmp.ne.s32.totalorder %s63, %s66
      %p72 = scmp.eq.s32.totalorder %s13, 0
      %p73 = por %p71, %p72
      %p74 = scmp.ne.s32.totalorder %s63, %s66
      %p75 = scmp.eq.s32.totalorder %s18, 1
      %p76 = por %p74, %p75
      %p77 = scmp.ne.s32.totalorder %s66, %s67
      %p78 = scmp.eq.s32.totalorder %s18, 0
      %p79 = por %p77, %p78
      %p80 = scmp.ne.s32.totalorder %s66, %s67
      %p81 = scmp.eq.s32.totalorder %s19, 1
      %p82 = por %p80, %p81
      %p84 = scmp.ne.s32.totalorder %s67, %s83
      %p85 = scmp.eq.s32.totalorder %s19, 0
      %p86 = por %p84, %p85
      %s87 = ssub.s32 %s20, %s32
      %s88 = ssub.s32 %s21, %s28
      %s89 = sor.u32 %s87, %s88
      %p90 = scmp.eq.s32.totalorder %s89, 0
      %s92 = sadd.s32 %s91, 1
      %s93 = scalar_select %p90, %s91, %s92
      %p96 = pneg %p90
      %p97 = scmp.eq.s32.totalorder %s13, 1
      %p98 = por %p96, %p97
      %p99 = scmp.ne.s32.totalorder %s91, %s94
      %p100 = scmp.eq.s32.totalorder %s13, 0
      %p101 = por %p99, %p100
      %p102 = scmp.ne.s32.totalorder %s91, %s94
      %p103 = scmp.eq.s32.totalorder %s18, 1
      %p104 = por %p102, %p103
      %p105 = scmp.ne.s32.totalorder %s94, %s95
      %p106 = scmp.eq.s32.totalorder %s18, 0
      %p107 = por %p105, %p106
      %p108 = scmp.ne.s32.totalorder %s94, %s95
      %p109 = scmp.eq.s32.totalorder %s19, 1
      %p110 = por %p108, %p109
      %p112 = scmp.ne.s32.totalorder %s95, %s111
      %p113 = scmp.eq.s32.totalorder %s19, 0
      %p114 = por %p112, %p113
      %s115 = ssub.s32 %s20, %s32
      %s116 = ssub.s32 %s21, %s28
      %s117 = sor.u32 %s115, %s116
      %p118 = scmp.eq.s32.totalorder %s117, 0
      %s120 = sadd.s32 %s119, 1
      %s121 = scalar_select %p118, %s119, %s120
      %p124 = pneg %p118
      %p125 = scmp.eq.s32.totalorder %s13, 1
      %p126 = por %p124, %p125
      %p127 = scmp.ne.s32.totalorder %s119, %s122
      %p128 = scmp.eq.s32.totalorder %s13, 0
      %p129 = por %p127, %p128
      %p130 = scmp.ne.s32.totalorder %s119, %s122
      %p131 = scmp.eq.s32.totalorder %s18, 1
      %p132 = por %p130, %p131
      %p133 = scmp.ne.s32.totalorder %s122, %s123
      %p134 = scmp.eq.s32.totalorder %s18, 0
      %p135 = por %p133, %p134
      %p136 = scmp.ne.s32.totalorder %s122, %s123
      %p137 = scmp.eq.s32.totalorder %s19, 1
      %p138 = por %p136, %p137
      %p140 = scmp.ne.s32.totalorder %s123, %s139
      %p141 = scmp.eq.s32.totalorder %s19, 0
      %p142 = por %p140, %p141
      %p143 = scmp.le.s32.totalorder 1, %s13
      %p144 = scmp.lt.s32.totalorder %s13, 3
      %p145 = pnand %p143, %p144
      %p146 = pneg %p145
      // Predicated region
      $region9: #{tpu_custom_call.1} parent=5 // pred_check
        _
      $region10: #{tpu_custom_call.1} parent=5 // pred_check_branch
        %148 = sbr.rel (%p145) target = $region12
      $region11: #{tpu_custom_call.1} parent=5 // pred_region
        %s149 = ssub.s32 %s13, 1
        // Predicated region
        $region13: #{tpu_custom_call.1} parent=11 // pred_check
          %p150 = pneg %p79
        $region14: #{tpu_custom_call.1} parent=11 // pred_check_branch
          %152 = sbr.rel (%p150) target = $region16
        $region15: #{tpu_custom_call.1} parent=11 // pred_region
          %p153 = scmp.lt.s32.totalorder %s23, 0
          %s154 = scalar_select %p153, %s23, 0
          %s155 = smul.addr %s154, 8
          %s156 = scalar_lea.vmem %s1, %s155
        $region16: #{tpu_custom_call.1} parent=11 // pred_fallthru
          _
      $region12: #{tpu_custom_call.1} parent=5 // pred_fallthru
        _
      %p157 = scmp.lt.s32.totalorder %s13, 2
      // Predicated region
      $region17: #{tpu_custom_call.1} parent=5 // pred_check
        %p158 = pneg %p157
      $region18: #{tpu_custom_call.1} parent=5 // pred_check_branch
        %160 = sbr.rel (%p158) target = $region20
      $region19: #{tpu_custom_call.1} parent=5 // pred_region
        // Predicated region
        $region21: #{tpu_custom_call.1} parent=19 // pred_check
          %p161 = pneg %p47
        $region22: #{tpu_custom_call.1} parent=19 // pred_check_branch
          %163 = sbr.rel (%p161) target = $region24
        $region23: #{tpu_custom_call.1} parent=19 // pred_region
          %p164 = scmp.lt.s32.totalorder %s20, 1
          %s165 = scalar_select %p164, %s20, 1
          %p166 = scmp.lt.s32.totalorder %s21, 0
          %s167 = scalar_select %p166, %s21, 0
          %s168 = smul.addr %s165, 32
          %s169 = sadd.s32 %s167, %s168
          %s170 = smul.addr %s169, 8
          %s171 = scalar_lea.vmem %s0, %s170
        $region24: #{tpu_custom_call.1} parent=19 // pred_fallthru
          _
      $region20: #{tpu_custom_call.1} parent=5 // pred_fallthru
        _
      %p172 = scmp.le.s32.totalorder 1, %s13
      %p173 = scmp.lt.s32.totalorder %s13, 3
      %p174 = pnand %p172, %p173
      %p175 = pneg %p174
      // Predicated region
      $region25: #{tpu_custom_call.1} parent=5 // pred_check
        _
      $region26: #{tpu_custom_call.1} parent=5 // pred_check_branch
        %177 = sbr.rel (%p174) target = $region28
      $region27: #{tpu_custom_call.1} parent=5 // pred_region
        %s178 = ssub.s32 %s13, 1
        %p179 = scmp.lt.s32.totalorder %s22, 1
        %s180 = scalar_select %p179, %s22, 1
        %p181 = scmp.lt.s32.totalorder %s23, 0
        %s182 = scalar_select %p181, %s23, 0
        %s183 = smul.addr %s180, 32
        %s184 = sadd.s32 %s182, %s183
        %s185 = smul.addr %s184, 8
        %s186 = scalar_lea.vmem %s0, %s185
        %p187 = pneg %p53
        %p188 = pneg %p50
        %p189 = scmp.lt.s32.totalorder %s23, 0
        %s190 = scalar_select %p189, %s23, 0
        %s191 = smul.addr %s190, 8
        %s192 = scalar_lea.vmem %s1, %s191
        %p193 = pneg %p79
        %p194 = pneg %p76
        %p195 = pneg %p107
        %p196 = pneg %p104
        %p197 = scmp.lt.s32.totalorder %s22, 1
        %s198 = scalar_select %p197, %s22, 1
        %p199 = scmp.lt.s32.totalorder %s23, 0
        %s200 = scalar_select %p199, %s23, 0
        %s201 = smul.addr %s198, 8
        %s202 = sadd.s32 %s200, %s201
        %s203 = smul.addr %s202, 8
        %s204 = scalar_lea.vmem %s2, %s203
        %p205 = pneg %p135
        %p206 = pneg %p132
        %s207 = sand.u32 %s122, 1
        %s208 = scalar_lea.sflag [#allocation4], %s207
        %s209 = sand.u32 %s122, 1
        %s210 = smul.addr %s209, 2
        %s211 = scalar_lea.vmem [#allocation3], %s210
        %p212 = scmp.lt.s32.totalorder %s22, 1
        %s213 = scalar_select %p212, %s22, 1
        %p214 = scmp.lt.s32.totalorder %s23, 0
        %s215 = scalar_select %p214, %s23, 0
        %s216 = smul.addr %s213, 32
        %s217 = sadd.s32 %s215, %s216
        %s218 = smul.addr %s217, 8
        %s219 = scalar_lea.vmem %s0, %s218
        %p220 = scmp.lt.s32.totalorder %s23, 0
        %s221 = scalar_select %p220, %s23, 0
        %s222 = smul.addr %s221, 8
        %s223 = scalar_lea.vmem %s1, %s222
        %p224 = scmp.lt.s32.totalorder %s22, 1
        %s225 = scalar_select %p224, %s22, 1
        %p226 = scmp.lt.s32.totalorder %s23, 0
        %s227 = scalar_select %p226, %s23, 0
        %s228 = smul.addr %s225, 8
        %s229 = sadd.s32 %s227, %s228
        %s230 = smul.addr %s229, 8
        %s231 = scalar_lea.vmem %s2, %s230
        %v232 = vld [vmem:[%s223] sm:$0xff]
        %v233 = vld [vmem:[%s223 + $0x8] sm:$0x1]
        %vm234 = vcmask 31744
        %235 = vst.msk [vmem:[#allocation2] sm:$0xff] %vm234, 0.0
        %vm236 = vcmask 24576
        %237 = vst.msk [vmem:[#allocation2 + $0x8] sm:$0x1] %vm236, 0.0
        %238 = vst.msk [vmem:[#allocation2] sm:$0x1] %vm236, 0.0
        %239 = vst.msk [vmem:[#allocation2 + $0x10] sm:$0x1] %vm236, 0.0
        %240 = vst.msk [vmem:[#allocation2 + $0x20] sm:$0x1] %vm236, 0.0
        %241 = vst.msk [vmem:[#allocation2 + $0x30] sm:$0x1] %vm236, 0.0
        %242 = vst.msk [vmem:[#allocation2 + $0x40] sm:$0x1] %vm236, 0.0
        %243 = vst.msk [vmem:[#allocation2 + $0x50] sm:$0x1] %vm236, 0.0
        %244 = vst.msk [vmem:[#allocation2 + $0x60] sm:$0x1] %vm236, 0.0
        %245 = vst.msk [vmem:[#allocation2 + $0x70] sm:$0x1] %vm236, 0.0
        %246 = vst.msk [vmem:[#allocation2 + $0x80] sm:$0x1] %vm236, 0.0
        %s247 = scalar_lea.vmem %s219, 16
        %s248 = scalar_lea.vmem %s247, 1
        %v249 = vld [vmem:[%s248] ss:$2 sm:$0xff]
        %s250 = scalar_lea.vmem %s247, 33
        %v251 = vld [vmem:[%s250] ss:$2 sm:$0xff]
        %s252 = scalar_lea.vmem %s247, 65
        %v253 = vld [vmem:[%s252] ss:$2 sm:$0xff]
        %s254 = scalar_lea.vmem %s247, 97
        %v255 = vld [vmem:[%s254] ss:$2 sm:$0xff]
        %s256 = scalar_lea.vmem %s247, 129
        %v257 = vld [vmem:[%s256] ss:$2 sm:$0xff]
        %s258 = scalar_lea.vmem %s247, 161
        %v259 = vld [vmem:[%s258] ss:$2 sm:$0xff]
        %s260 = scalar_lea.vmem %s247, 193
        %v261 = vld [vmem:[%s260] ss:$2 sm:$0xff]
        %s262 = scalar_lea.vmem %s247, 225
        %v263 = vld [vmem:[%s262] ss:$2 sm:$0xff]
        %s264 = scalar_lea.vmem [#allocation2], 16
        %265 = vst.msk [vmem:[%s264 + $0x1] sm:$0xff] %vm234, %v249
        %266 = vst.msk [vmem:[%s264 + $0x11] sm:$0xff] %vm234, %v251
        %267 = vst.msk [vmem:[%s264 + $0x21] sm:$0xff] %vm234, %v253
        %268 = vst.msk [vmem:[%s264 + $0x31] sm:$0xff] %vm234, %v255
        %269 = vst.msk [vmem:[%s264 + $0x41] sm:$0xff] %vm234, %v257
        %270 = vst.msk [vmem:[%s264 + $0x51] sm:$0xff] %vm234, %v259
        %271 = vst.msk [vmem:[%s264 + $0x61] sm:$0xff] %vm234, %v261
        %272 = vst.msk [vmem:[%s264 + $0x71] sm:$0xff] %vm234, %v263
        %v273 = vld [vmem:[#allocation2] sm:$0xff]
        %v274 = vld [vmem:[#allocation2 + $0x10] sm:$0xff]
        %v275 = vld [vmem:[#allocation2 + $0x20] sm:$0xff]
        %v276 = vld [vmem:[#allocation2 + $0x30] sm:$0xff]
        %v277 = vld [vmem:[#allocation2 + $0x40] sm:$0xff]
        %v278 = vld [vmem:[#allocation2 + $0x50] sm:$0xff]
        %v279 = vld [vmem:[#allocation2 + $0x60] sm:$0xff]
        %v280 = vld [vmem:[#allocation2 + $0x70] sm:$0xff]
        %v281 = vlaneseq
        %v282 = vshrl.u32 %v281, 7
        %v283 = vsub.s32 0, %v282
        %v284 = vrot.slane %v232, %v283
        %v285 = vmul.f32 %v273, %v284
        %v286 = vmul.f32 %v274, %v284
        %v287 = vmul.f32 %v275, %v284
        %v288 = vmul.f32 %v276, %v284
        %v289 = vmul.f32 %v277, %v284
        %v290 = vmul.f32 %v278, %v284
        %v291 = vmul.f32 %v279, %v284
        %v292 = vmul.f32 %v280, %v284
        %v293 = vld [vmem:[#allocation2 + $0x1] sm:$0xff]
        %v294 = vld [vmem:[#allocation2 + $0x11] sm:$0xff]
        %v295 = vld [vmem:[#allocation2 + $0x21] sm:$0xff]
        %v296 = vld [vmem:[#allocation2 + $0x31] sm:$0xff]
        %v297 = vld [vmem:[#allocation2 + $0x41] sm:$0xff]
        %v298 = vld [vmem:[#allocation2 + $0x51] sm:$0xff]
        %v299 = vld [vmem:[#allocation2 + $0x61] sm:$0xff]
        %v300 = vld [vmem:[#allocation2 + $0x71] sm:$0xff]
        %v301 = vlaneseq
        %v302 = vshrl.u32 %v301, 7
        %v303 = vsub.s32 2, %v302
        %v304 = vrot.slane %v232, %v303
        %v305 = vmul.f32 %v293, %v304
        %v306 = vmul.f32 %v294, %v304
        %v307 = vmul.f32 %v295, %v304
        %v308 = vmul.f32 %v296, %v304
        %v309 = vmul.f32 %v297, %v304
        %v310 = vmul.f32 %v298, %v304
        %v311 = vmul.f32 %v299, %v304
        %v312 = vmul.f32 %v300, %v304
        %v313 = vadd.f32 %v285, %v305
        %v314 = vadd.f32 %v286, %v306
        %v315 = vadd.f32 %v287, %v307
        %v316 = vadd.f32 %v288, %v308
        %v317 = vadd.f32 %v289, %v309
        %v318 = vadd.f32 %v290, %v310
        %v319 = vadd.f32 %v291, %v311
        %v320 = vadd.f32 %v292, %v312
        %v321 = vld [vmem:[%s264] sm:$0xff]
        %v322 = vld [vmem:[%s264 + $0x10] sm:$0xff]
        %v323 = vld [vmem:[%s264 + $0x20] sm:$0xff]
        %v324 = vld [vmem:[%s264 + $0x30] sm:$0xff]
        %v325 = vld [vmem:[%s264 + $0x40] sm:$0xff]
        %v326 = vld [vmem:[%s264 + $0x50] sm:$0xff]
        %v327 = vld [vmem:[%s264 + $0x60] sm:$0xff]
        %v328 = vld [vmem:[%s264 + $0x70] sm:$0xff]
        %v329 = vlaneseq
        %v330 = vshrl.u32 %v329, 7
        %v331 = vsub.s32 6, %v330
        %v332 = vrot.slane %v232, %v331
        %v333 = vmul.f32 %v321, %v332
        %v334 = vmul.f32 %v322, %v332
        %v335 = vmul.f32 %v323, %v332
        %v336 = vmul.f32 %v324, %v332
        %v337 = vmul.f32 %v325, %v332
        %v338 = vmul.f32 %v326, %v332
        %v339 = vmul.f32 %v327, %v332
        %v340 = vmul.f32 %v328, %v332
        %v341 = vadd.f32 %v313, %v333
        %v342 = vadd.f32 %v314, %v334
        %v343 = vadd.f32 %v315, %v335
        %v344 = vadd.f32 %v316, %v336
        %v345 = vadd.f32 %v317, %v337
        %v346 = vadd.f32 %v318, %v338
        %v347 = vadd.f32 %v319, %v339
        %v348 = vadd.f32 %v320, %v340
        %v349 = vld [vmem:[%s264 + $0x1] sm:$0xff]
        %v350 = vld [vmem:[%s264 + $0x11] sm:$0xff]
        %v351 = vld [vmem:[%s264 + $0x21] sm:$0xff]
        %v352 = vld [vmem:[%s264 + $0x31] sm:$0xff]
        %v353 = vld [vmem:[%s264 + $0x41] sm:$0xff]
        %v354 = vld [vmem:[%s264 + $0x51] sm:$0xff]
        %v355 = vld [vmem:[%s264 + $0x61] sm:$0xff]
        %v356 = vld [vmem:[%s264 + $0x71] sm:$0xff]
        %v357 = vlaneseq
        %v358 = vshrl.u32 %v357, 7
        %v359 = vsub.s32 0, %v358
        %v360 = vrot.slane %v233, %v359
        %v361 = vmul.f32 %v349, %v360
        %v362 = vmul.f32 %v350, %v360
        %v363 = vmul.f32 %v351, %v360
        %v364 = vmul.f32 %v352, %v360
        %v365 = vmul.f32 %v353, %v360
        %v366 = vmul.f32 %v354, %v360
        %v367 = vmul.f32 %v355, %v360
        %v368 = vmul.f32 %v356, %v360
        %v369 = vadd.f32 %v341, %v361
        %v370 = vadd.f32 %v342, %v362
        %v371 = vadd.f32 %v343, %v363
        %v372 = vadd.f32 %v344, %v364
        %v373 = vadd.f32 %v345, %v365
        %v374 = vadd.f32 %v346, %v366
        %v375 = vadd.f32 %v347, %v367
        %v376 = vadd.f32 %v348, %v368
        %377 = vst.msk [vmem:[#allocation2] sm:$0xff] %vm234, 0.0
        %378 = vst.msk [vmem:[#allocation2 + $0x8] sm:$0x1] %vm236, 0.0
        %v379 = vld [vmem:[%s247] ss:$2 sm:$0xff]
        %s380 = scalar_lea.vmem %s247, 32
        %v381 = vld [vmem:[%s380] ss:$2 sm:$0xff]
        %s382 = scalar_lea.vmem %s247, 64
        %v383 = vld [vmem:[%s382] ss:$2 sm:$0xff]
        %s384 = scalar_lea.vmem %s247, 96
        %v385 = vld [vmem:[%s384] ss:$2 sm:$0xff]
        %s386 = scalar_lea.vmem %s247, 128
        %v387 = vld [vmem:[%s386] ss:$2 sm:$0xff]
        %s388 = scalar_lea.vmem %s247, 160
        %v389 = vld [vmem:[%s388] ss:$2 sm:$0xff]
        %s390 = scalar_lea.vmem %s247, 192
        %v391 = vld [vmem:[%s390] ss:$2 sm:$0xff]
        %s392 = scalar_lea.vmem %s247, 224
        %v393 = vld [vmem:[%s392] ss:$2 sm:$0xff]
        %394 = vst.msk [vmem:[%s264] sm:$0xff] %vm234, %v379
        %395 = vst.msk [vmem:[%s264 + $0x10] sm:$0xff] %vm234, %v381
        %396 = vst.msk [vmem:[%s264 + $0x20] sm:$0xff] %vm234, %v383
        %397 = vst.msk [vmem:[%s264 + $0x30] sm:$0xff] %vm234, %v385
        %398 = vst.msk [vmem:[%s264 + $0x40] sm:$0xff] %vm234, %v387
        %399 = vst.msk [vmem:[%s264 + $0x50] sm:$0xff] %vm234, %v389
        %400 = vst.msk [vmem:[%s264 + $0x60] sm:$0xff] %vm234, %v391
        %401 = vst.msk [vmem:[%s264 + $0x70] sm:$0xff] %vm234, %v393
        %v402 = vld [vmem:[#allocation2] sm:$0xff]
        %v403 = vld [vmem:[#allocation2 + $0x10] sm:$0xff]
        %v404 = vld [vmem:[#allocation2 + $0x20] sm:$0xff]
        %v405 = vld [vmem:[#allocation2 + $0x30] sm:$0xff]
        %v406 = vld [vmem:[#allocation2 + $0x40] sm:$0xff]
        %v407 = vld [vmem:[#allocation2 + $0x50] sm:$0xff]
        %v408 = vld [vmem:[#allocation2 + $0x60] sm:$0xff]
        %v409 = vld [vmem:[#allocation2 + $0x70] sm:$0xff]
        %v410 = vlaneseq
        %v411 = vshrl.u32 %v410, 7
        %v412 = vsub.s32 1, %v411
        %v413 = vrot.slane %v232, %v412
        %v414 = vmul.f32 %v402, %v413
        %v415 = vmul.f32 %v403, %v413
        %v416 = vmul.f32 %v404, %v413
        %v417 = vmul.f32 %v405, %v413
        %v418 = vmul.f32 %v406, %v413
        %v419 = vmul.f32 %v407, %v413
        %v420 = vmul.f32 %v408, %v413
        %v421 = vmul.f32 %v409, %v413
        %v422 = vld [vmem:[%s264] sm:$0xff]
        %v423 = vld [vmem:[%s264 + $0x10] sm:$0xff]
        %v424 = vld [vmem:[%s264 + $0x20] sm:$0xff]
        %v425 = vld [vmem:[%s264 + $0x30] sm:$0xff]
        %v426 = vld [vmem:[%s264 + $0x40] sm:$0xff]
        %v427 = vld [vmem:[%s264 + $0x50] sm:$0xff]
        %v428 = vld [vmem:[%s264 + $0x60] sm:$0xff]
        %v429 = vld [vmem:[%s264 + $0x70] sm:$0xff]
        %v430 = vlaneseq
        %v431 = vshrl.u32 %v430, 7
        %v432 = vsub.s32 7, %v431
        %v433 = vrot.slane %v232, %v432
        %v434 = vmul.f32 %v422, %v433
        %v435 = vmul.f32 %v423, %v433
        %v436 = vmul.f32 %v424, %v433
        %v437 = vmul.f32 %v425, %v433
        %v438 = vmul.f32 %v426, %v433
        %v439 = vmul.f32 %v427, %v433
        %v440 = vmul.f32 %v428, %v433
        %v441 = vmul.f32 %v429, %v433
        %v442 = vadd.f32 %v414, %v434
        %v443 = vadd.f32 %v415, %v435
        %v444 = vadd.f32 %v416, %v436
        %v445 = vadd.f32 %v417, %v437
        %v446 = vadd.f32 %v418, %v438
        %v447 = vadd.f32 %v419, %v439
        %v448 = vadd.f32 %v420, %v440
        %v449 = vadd.f32 %v421, %v441
        %v450 = vadd.f32 %v369, %v442
        %v451 = vadd.f32 %v370, %v443
        %v452 = vadd.f32 %v371, %v444
        %v453 = vadd.f32 %v372, %v445
        %v454 = vadd.f32 %v373, %v446
        %v455 = vadd.f32 %v374, %v447
        %v456 = vadd.f32 %v375, %v448
        %v457 = vadd.f32 %v376, %v449
        %458 = vst.msk [vmem:[#allocation2] sm:$0x1] %vm236, 0.0
        %459 = vst.msk [vmem:[#allocation2 + $0x10] sm:$0x1] %vm236, 0.0
        %460 = vst.msk [vmem:[#allocation2 + $0x20] sm:$0x1] %vm236, 0.0
        %461 = vst.msk [vmem:[#allocation2 + $0x30] sm:$0x1] %vm236, 0.0
        %462 = vst.msk [vmem:[#allocation2 + $0x40] sm:$0x1] %vm236, 0.0
        %463 = vst.msk [vmem:[#allocation2 + $0x50] sm:$0x1] %vm236, 0.0
        %464 = vst.msk [vmem:[#allocation2 + $0x60] sm:$0x1] %vm236, 0.0
        %465 = vst.msk [vmem:[#allocation2 + $0x70] sm:$0x1] %vm236, 0.0
        %466 = vst.msk [vmem:[#allocation2 + $0x80] sm:$0x1] %vm236, 0.0
        %s467 = scalar_lea.vmem %s219, 1
        %v468 = vld [vmem:[%s467] ss:$2 sm:$0xff]
        %s469 = scalar_lea.vmem %s219, 33
        %v470 = vld [vmem:[%s469] ss:$2 sm:$0xff]
        %s471 = scalar_lea.vmem %s219, 65
        %v472 = vld [vmem:[%s471] ss:$2 sm:$0xff]
        %s473 = scalar_lea.vmem %s219, 97
        %v474 = vld [vmem:[%s473] ss:$2 sm:$0xff]
        %s475 = scalar_lea.vmem %s219, 129
        %v476 = vld [vmem:[%s475] ss:$2 sm:$0xff]
        %s477 = scalar_lea.vmem %s219, 161
        %v478 = vld [vmem:[%s477] ss:$2 sm:$0xff]
        %s479 = scalar_lea.vmem %s219, 193
        %v480 = vld [vmem:[%s479] ss:$2 sm:$0xff]
        %s481 = scalar_lea.vmem %s219, 225
        %v482 = vld [vmem:[%s481] ss:$2 sm:$0xff]
        %483 = vst.msk [vmem:[#allocation2 + $0x1] sm:$0xff] %vm234, %v468
        %484 = vst.msk [vmem:[#allocation2 + $0x11] sm:$0xff] %vm234, %v470
        %485 = vst.msk [vmem:[#allocation2 + $0x21] sm:$0xff] %vm234, %v472
        %486 = vst.msk [vmem:[#allocation2 + $0x31] sm:$0xff] %vm234, %v474
        %487 = vst.msk [vmem:[#allocation2 + $0x41] sm:$0xff] %vm234, %v476
        %488 = vst.msk [vmem:[#allocation2 + $0x51] sm:$0xff] %vm234, %v478
        %489 = vst.msk [vmem:[#allocation2 + $0x61] sm:$0xff] %vm234, %v480
        %490 = vst.msk [vmem:[#allocation2 + $0x71] sm:$0xff] %vm234, %v482
        %v491 = vld [vmem:[#allocation2] sm:$0xff]
        %v492 = vld [vmem:[#allocation2 + $0x10] sm:$0xff]
        %v493 = vld [vmem:[#allocation2 + $0x20] sm:$0xff]
        %v494 = vld [vmem:[#allocation2 + $0x30] sm:$0xff]
        %v495 = vld [vmem:[#allocation2 + $0x40] sm:$0xff]
        %v496 = vld [vmem:[#allocation2 + $0x50] sm:$0xff]
        %v497 = vld [vmem:[#allocation2 + $0x60] sm:$0xff]
        %v498 = vld [vmem:[#allocation2 + $0x70] sm:$0xff]
        %v499 = vlaneseq
        %v500 = vshrl.u32 %v499, 7
        %v501 = vsub.s32 3, %v500
        %v502 = vrot.slane %v232, %v501
        %v503 = vmul.f32 %v491, %v502
        %v504 = vmul.f32 %v492, %v502
        %v505 = vmul.f32 %v493, %v502
        %v506 = vmul.f32 %v494, %v502
        %v507 = vmul.f32 %v495, %v502
        %v508 = vmul.f32 %v496, %v502
        %v509 = vmul.f32 %v497, %v502
        %v510 = vmul.f32 %v498, %v502
        %v511 = vld [vmem:[#allocation2 + $0x1] sm:$0xff]
        %v512 = vld [vmem:[#allocation2 + $0x11] sm:$0xff]
        %v513 = vld [vmem:[#allocation2 + $0x21] sm:$0xff]
        %v514 = vld [vmem:[#allocation2 + $0x31] sm:$0xff]
        %v515 = vld [vmem:[#allocation2 + $0x41] sm:$0xff]
        %v516 = vld [vmem:[#allocation2 + $0x51] sm:$0xff]
        %v517 = vld [vmem:[#allocation2 + $0x61] sm:$0xff]
        %v518 = vld [vmem:[#allocation2 + $0x71] sm:$0xff]
        %v519 = vlaneseq
        %v520 = vshrl.u32 %v519, 7
        %v521 = vsub.s32 5, %v520
        %v522 = vrot.slane %v232, %v521
        %v523 = vmul.f32 %v511, %v522
        %v524 = vmul.f32 %v512, %v522
        %v525 = vmul.f32 %v513, %v522
        %v526 = vmul.f32 %v514, %v522
        %v527 = vmul.f32 %v515, %v522
        %v528 = vmul.f32 %v516, %v522
        %v529 = vmul.f32 %v517, %v522
        %v530 = vmul.f32 %v518, %v522
        %v531 = vadd.f32 %v503, %v523
        %v532 = vadd.f32 %v504, %v524
        %v533 = vadd.f32 %v505, %v525
        %v534 = vadd.f32 %v506, %v526
        %v535 = vadd.f32 %v507, %v527
        %v536 = vadd.f32 %v508, %v528
        %v537 = vadd.f32 %v509, %v529
        %v538 = vadd.f32 %v510, %v530
        %v539 = vadd.f32 %v450, %v531
        %v540 = vadd.f32 %v451, %v532
        %v541 = vadd.f32 %v452, %v533
        %v542 = vadd.f32 %v453, %v534
        %v543 = vadd.f32 %v454, %v535
        %v544 = vadd.f32 %v455, %v536
        %v545 = vadd.f32 %v456, %v537
        %v546 = vadd.f32 %v457, %v538
        %v547 = vld [vmem:[%s219] ss:$2 sm:$0xff]
        %s548 = scalar_lea.vmem %s219, 32
        %v549 = vld [vmem:[%s548] ss:$2 sm:$0xff]
        %s550 = scalar_lea.vmem %s219, 64
        %v551 = vld [vmem:[%s550] ss:$2 sm:$0xff]
        %s552 = scalar_lea.vmem %s219, 96
        %v553 = vld [vmem:[%s552] ss:$2 sm:$0xff]
        %s554 = scalar_lea.vmem %s219, 128
        %v555 = vld [vmem:[%s554] ss:$2 sm:$0xff]
        %s556 = scalar_lea.vmem %s219, 160
        %v557 = vld [vmem:[%s556] ss:$2 sm:$0xff]
        %s558 = scalar_lea.vmem %s219, 192
        %v559 = vld [vmem:[%s558] ss:$2 sm:$0xff]
        %s560 = scalar_lea.vmem %s219, 224
        %v561 = vld [vmem:[%s560] ss:$2 sm:$0xff]
        %562 = vst.msk [vmem:[#allocation2] sm:$0xff] %vm234, %v547
        %563 = vst.msk [vmem:[#allocation2 + $0x10] sm:$0xff] %vm234, %v549
        %564 = vst.msk [vmem:[#allocation2 + $0x20] sm:$0xff] %vm234, %v551
        %565 = vst.msk [vmem:[#allocation2 + $0x30] sm:$0xff] %vm234, %v553
        %566 = vst.msk [vmem:[#allocation2 + $0x40] sm:$0xff] %vm234, %v555
        %567 = vst.msk [vmem:[#allocation2 + $0x50] sm:$0xff] %vm234, %v557
        %568 = vst.msk [vmem:[#allocation2 + $0x60] sm:$0xff] %vm234, %v559
        %569 = vst.msk [vmem:[#allocation2 + $0x70] sm:$0xff] %vm234, %v561
        %v570 = vld [vmem:[#allocation2] sm:$0xff]
        %v571 = vld [vmem:[#allocation2 + $0x10] sm:$0xff]
        %v572 = vld [vmem:[#allocation2 + $0x20] sm:$0xff]
        %v573 = vld [vmem:[#allocation2 + $0x30] sm:$0xff]
        %v574 = vld [vmem:[#allocation2 + $0x40] sm:$0xff]
        %v575 = vld [vmem:[#allocation2 + $0x50] sm:$0xff]
        %v576 = vld [vmem:[#allocation2 + $0x60] sm:$0xff]
        %v577 = vld [vmem:[#allocation2 + $0x70] sm:$0xff]
        %v578 = vlaneseq
        %v579 = vshrl.u32 %v578, 7
        %v580 = vsub.s32 4, %v579
        %v581 = vrot.slane %v232, %v580
        %v582 = vmul.f32 %v570, %v581
        %v583 = vmul.f32 %v571, %v581
        %v584 = vmul.f32 %v572, %v581
        %v585 = vmul.f32 %v573, %v581
        %v586 = vmul.f32 %v574, %v581
        %v587 = vmul.f32 %v575, %v581
        %v588 = vmul.f32 %v576, %v581
        %v589 = vmul.f32 %v577, %v581
        %v590 = vadd.f32 %v539, %v582
        %v591 = vadd.f32 %v540, %v583
        %v592 = vadd.f32 %v541, %v584
        %v593 = vadd.f32 %v542, %v585
        %v594 = vadd.f32 %v543, %v586
        %v595 = vadd.f32 %v544, %v587
        %v596 = vadd.f32 %v545, %v588
        %v597 = vadd.f32 %v546, %v589
        %598 = vst.msk [vmem:[%s231] sm:$0xff] %vm234, %v590
        %599 = vst.msk [vmem:[%s231 + $0x8] sm:$0xff] %vm234, %v591
        %600 = vst.msk [vmem:[%s231 + $0x10] sm:$0xff] %vm234, %v592
        %601 = vst.msk [vmem:[%s231 + $0x18] sm:$0xff] %vm234, %v593
        %602 = vst.msk [vmem:[%s231 + $0x20] sm:$0xff] %vm234, %v594
        %603 = vst.msk [vmem:[%s231 + $0x28] sm:$0xff] %vm234, %v595
        %604 = vst.msk [vmem:[%s231 + $0x30] sm:$0xff] %vm234, %v596
        %605 = vst.msk [vmem:[%s231 + $0x38] sm:$0xff] %vm234, %v597
        %v606 = vsel %vm234, %v590, 0.0
        %v607 = vsel %vm234, %v591, 0.0
        %v608 = vadd.f32 %v606, %v607
        %v609 = vsel %vm234, %v592, 0.0
        %v610 = vadd.f32 %v608, %v609
        %v611 = vsel %vm234, %v593, 0.0
        %v612 = vadd.f32 %v610, %v611
        %v613 = vsel %vm234, %v594, 0.0
        %v614 = vadd.f32 %v612, %v613
        %v615 = vsel %vm234, %v595, 0.0
        %v616 = vadd.f32 %v614, %v615
        %v617 = vsel %vm234, %v596, 0.0
        %v618 = vadd.f32 %v616, %v617
        %v619 = vsel %vm234, %v597, 0.0
        %v620 = vadd.f32 %v618, %v619
        %v621 = vrot.slane %v620, 4
        %v622 = vadd.f32 %v620, %v621
        %v623 = vrot.slane %v622, 2
        %v624 = vadd.f32 %v622, %v623
        %v625 = vrot.slane %v624, 1
        %v626 = vadd.f32 %v624, %v625
        %v627 = vrcp.pop 64.0
        %v628 = vmul.f32 %v626, %v627
        %v629 = vsub.f32 %v590, %v628
        %v630 = vsub.f32 %v591, %v628
        %v631 = vsub.f32 %v592, %v628
        %v632 = vsub.f32 %v593, %v628
        %v633 = vsub.f32 %v594, %v628
        %v634 = vsub.f32 %v595, %v628
        %v635 = vsub.f32 %v596, %v628
        %v636 = vsub.f32 %v597, %v628
        %v637 = vmul.f32 %v629, %v629
        %v638 = vmul.f32 %v630, %v630
        %v639 = vmul.f32 %v631, %v631
        %v640 = vmul.f32 %v632, %v632
        %v641 = vmul.f32 %v633, %v633
        %v642 = vmul.f32 %v634, %v634
        %v643 = vmul.f32 %v635, %v635
        %v644 = vmul.f32 %v636, %v636
        %v645 = vsel %vm234, %v637, 0.0
        %v646 = vsel %vm234, %v638, 0.0
        %v647 = vadd.f32 %v645, %v646
        %v648 = vsel %vm234, %v639, 0.0
        %v649 = vadd.f32 %v647, %v648
        %v650 = vsel %vm234, %v640, 0.0
        %v651 = vadd.f32 %v649, %v650
        %v652 = vsel %vm234, %v641, 0.0
        %v653 = vadd.f32 %v651, %v652
        %v654 = vsel %vm234, %v642, 0.0
        %v655 = vadd.f32 %v653, %v654
        %v656 = vsel %vm234, %v643, 0.0
        %v657 = vadd.f32 %v655, %v656
        %v658 = vsel %vm234, %v644, 0.0
        %v659 = vadd.f32 %v657, %v658
        %v660 = vrot.slane %v659, 4
        %v661 = vadd.f32 %v659, %v660
        %v662 = vrot.slane %v661, 2
        %v663 = vadd.f32 %v661, %v662
        %v664 = vrot.slane %v663, 1
        %v665 = vadd.f32 %v663, %v664
        %666 = vst.msk [vmem:[%s211] sm:$0x1] %vm236, %v626
        %667 = vst.msk [vmem:[%s211 + $0x1] sm:$0x1] %vm236, %v665
        %p668 = scmp.lt.s32.totalorder %s22, 1
        %s669 = scalar_select %p668, %s22, 1
        %p670 = scmp.lt.s32.totalorder %s23, 0
        %s671 = scalar_select %p670, %s23, 0
        %s672 = smul.addr %s669, 8
        %s673 = sadd.s32 %s671, %s672
        %s674 = smul.addr %s673, 8
        %s675 = scalar_lea.vmem %s2, %s674
        %s676 = sand.u32 %s122, 1
        %s677 = scalar_lea.sflag [#allocation4], %s676
        %s678 = sand.u32 %s122, 1
        %s679 = smul.addr %s678, 2
        %s680 = scalar_lea.vmem [#allocation3], %s679
        // Predicated region
        $region29: #{tpu_custom_call.1} parent=27 // pred_check
          %p681 = pneg %p104
        $region30: #{tpu_custom_call.1} parent=27 // pred_check_branch
          %683 = sbr.rel (%p681) target = $region32
        $region31: #{tpu_custom_call.1} parent=27 // pred_region
          _
        $region32: #{tpu_custom_call.1} parent=27 // pred_fallthru
          _
        // Predicated region
        $region33: #{tpu_custom_call.1} parent=27 // pred_check
          %p684 = pneg %p132
        $region34: #{tpu_custom_call.1} parent=27 // pred_check_branch
          %686 = sbr.rel (%p684) target = $region36
        $region35: #{tpu_custom_call.1} parent=27 // pred_region
          %s688 = ssub.s32 32, 32
          %689 = vsyncadd %s677, %s688
          %s690 = sadd.s32 %s23, %s22
          %s691 = smul.addr %s690, 32
          %s692 = scalar_lea.hbm %s3, %s691
          %s694 = sshll.u32 %s680, 4
          %s695 = int_to_ptr.vmem [resolvable:$true] %s694
          %697 = dma.vmem_to_hbm [thread:$0]  %s695, 32, %s692, %s677
        $region36: #{tpu_custom_call.1} parent=27 // pred_fallthru
          _
      $region28: #{tpu_custom_call.1} parent=5 // pred_fallthru
        _
      %p698 = scmp.le.s32.totalorder 2, %s13
      // Predicated region
      $region37: #{tpu_custom_call.1} parent=5 // pred_check
        %p699 = pneg %p698
      $region38: #{tpu_custom_call.1} parent=5 // pred_check_branch
        %701 = sbr.rel (%p699) target = $region40
      $region39: #{tpu_custom_call.1} parent=5 // pred_region
        %s702 = ssub.s32 %s13, 2
        // Predicated region
        $region41: #{tpu_custom_call.1} parent=39 // pred_check
          %p703 = pneg %p110
        $region42: #{tpu_custom_call.1} parent=39 // pred_check_branch
          %705 = sbr.rel (%p703) target = $region44
        $region43: #{tpu_custom_call.1} parent=39 // pred_region
          %p706 = scmp.lt.s32.totalorder %s24, 1
          %s707 = scalar_select %p706, %s24, 1
          %p708 = scmp.lt.s32.totalorder %s25, 0
          %s709 = scalar_select %p708, %s25, 0
          %s710 = smul.addr %s707, 8
          %s711 = sadd.s32 %s709, %s710
          %s712 = smul.addr %s711, 8
          %s713 = scalar_lea.vmem %s2, %s712
        $region44: #{tpu_custom_call.1} parent=39 // pred_fallthru
          _
        // Predicated region
        $region45: #{tpu_custom_call.1} parent=39 // pred_check
          %p714 = pneg %p138
        $region46: #{tpu_custom_call.1} parent=39 // pred_check_branch
          %716 = sbr.rel (%p714) target = $region48
        $region47: #{tpu_custom_call.1} parent=39 // pred_region
          %s717 = sand.u32 %s123, 1
          %s718 = scalar_lea.sflag [#allocation4], %s717
          %s719 = sand.u32 %s123, 1
          %s720 = smul.addr %s719, 2
          %s721 = scalar_lea.vmem [#allocation3], %s720
          %722 = dma.done %s718, 32
        $region48: #{tpu_custom_call.1} parent=39 // pred_fallthru
          _
      $region40: #{tpu_custom_call.1} parent=5 // pred_fallthru
        _
    $region6: #{tpu_custom_call.1} parent=1 // loop_footer
      %s17 = sadd.s32 1, %s13
    $region7: #{tpu_custom_call.1} parent=1 // loop_footer_branch
      %12 = sbr.rel target = $region3
    $region8: #{tpu_custom_call.1} parent=1 // loop_exit
      _
    %723 = vsyncpa [#allocation4], 1
    %s724 = scalar_lea.sflag [#allocation4], 1
    %725 = vsyncpa %s724, 1

</llo_original>
